<compile_context>
chip_gen: v7x
topology: tpu7x:2x2x1
jax: 0.10.0
libtpu: 0.0.40
codegen_flags: <defaults>
</compile_context>

<pallas_src>
import jax
import jax.numpy as jnp
from jax.experimental import pallas as pl
from jax.experimental.pallas import tpu as pltpu


K_SIZE = 3  # ECA Conv1d kernel size (module default)


def _eca1d_kernel(w_ref, x_ref, o_ref):
    # x_ref block: (1, L, C) -> work on the (L, C) slab of one sample.
    x = x_ref[0].astype(jnp.float32)                       # (L, C)
    C = x.shape[1]

    # ---- AdaptiveAvgPool1d(1): per-channel mean over the L tokens -> (1, C) -------
    y = jnp.mean(x, axis=0, keepdims=True)                 # XLU cross-sublane reduce

    # ---- Conv1d(1, 1, k, padding=k//2, bias=False) along the channel axis ---------
    # z[c] = sum_t w[t] * y[c + t - k//2]  (zero padded at the edges)
    # expressed as y @ M, M[j, c] = w[k//2 - (c - j)] on the band, 0 elsewhere.
    row = jax.lax.broadcasted_iota(jnp.int32, (C, C), 0)
    col = jax.lax.broadcasted_iota(jnp.int32, (C, C), 1)
    d = col - row
    half = (K_SIZE - 1) // 2
    band = jnp.zeros((C, C), jnp.float32)
    for t in range(K_SIZE):                                # static k-tap loop
        band = jnp.where(d == half - t, w_ref[t], band)
    z = jnp.dot(y, band, preferred_element_type=jnp.float32)   # (1, C)

    # ---- sigmoid gate: EUP exp + approximate reciprocal (off the VALU path) -------
    gate = pl.reciprocal(1.0 + jnp.exp(-z), approx=True)   # (1, C)

    # ---- x * gate broadcast over all tokens: the single fused output store --------
    o_ref[0] = (x * gate).astype(o_ref.dtype)


def eca_layer_1d(x, w):
    """x: (B, L, C) channels-last tokens; w: (K_SIZE,) Conv1d weight (bias=False)."""
    Bn, L, C = x.shape
    assert w.shape == (K_SIZE,)
    return pl.pallas_call(
        _eca1d_kernel,
        out_shape=jax.ShapeDtypeStruct((Bn, L, C), x.dtype),
        grid=(Bn,),
        in_specs=[
            pl.BlockSpec(memory_space=pltpu.MemorySpace.SMEM),  # 3-tap weight (scalars)
            pl.BlockSpec((1, L, C), lambda b: (b, 0, 0)),       # one sample per step
        ],
        out_specs=pl.BlockSpec((1, L, C), lambda b: (b, 0, 0)),
        compiler_params=pltpu.CompilerParams(
            dimension_semantics=("parallel",)),                 # megacore (v7x: 2 TCs)
    )(w, x)


def eca_layer_1d_ref(x, w):
    """Pure-JAX reference mirroring the PyTorch forward exactly."""
    y = jnp.mean(x, axis=1)                                     # (B, C)
    yp = jnp.pad(y, ((0, 0), (1, 1)))
    z = w[0] * yp[:, :-2] + w[1] * yp[:, 1:-1] + w[2] * yp[:, 2:]
    return x * jax.nn.sigmoid(z)[:, None, :]


if __name__ == "__main__":
    B, L, C = 2, 64, 128          # small demo shapes; C=128 keeps stores lane-dense
    key = jax.random.PRNGKey(0)
    kx, kw = jax.random.split(key)
    x = jax.random.normal(kx, (B, L, C), dtype=jnp.float32)
    w = (0.1 * jax.random.normal(kw, (K_SIZE,))).astype(jnp.float32)

    out = jax.block_until_ready(eca_layer_1d(x, w))
    ref = eca_layer_1d_ref(x, w)

    assert out.shape == (B, L, C) and out.dtype == jnp.float32
    assert bool(jnp.all(jnp.isfinite(out)))
    # loose tolerance: the sigmoid uses the approximate EUP reciprocal
    assert bool(jnp.allclose(out, ref, rtol=1e-2, atol=1e-2))
    print("KERNEL_OK")
</pallas_src>

<mosaic_0001>
module attributes {stable_mosaic.version = 11 : i64} {
  func.func @_eca1d_kernel(%arg0: i32, %arg1: memref<3xf32, #tpu.memory_space<smem>>, %arg2: memref<1x64x128xf32, #tpu.memory_space<vmem>>, %arg3: memref<1x64x128xf32, #tpu.memory_space<vmem>>) attributes {dimension_semantics = [#tpu.dimension_semantics<parallel>], iteration_bounds = array<i64: 2>, scalar_prefetch = 0 : i64, scratch_operands = 0 : i64, tpu.core_type = #tpu.core_type<tc>, window_params = [{transform_indices = @transform_0, window_bounds = array<i64: 3>}, {transform_indices = @transform_1, window_bounds = array<i64: 1, 64, 128>}, {transform_indices = @transform_2, window_bounds = array<i64: 1, 64, 128>}]} {
    %c0 = arith.constant 0 : index
    %c0_0 = arith.constant 0 : index
    %c0_1 = arith.constant 0 : index
    %0 = vector.load %arg2[%c0, %c0_0, %c0_1] : memref<1x64x128xf32, #tpu.memory_space<vmem>>, vector<1x64x128xf32>
    %1 = vector.shape_cast %0 : vector<1x64x128xf32> to vector<64x128xf32>
    %cst = arith.constant dense<0.000000e+00> : vector<128xf32>
    %2 = vector.multi_reduction <add>, %1, %cst [0] : vector<64x128xf32> to vector<128xf32>
    %3 = vector.shape_cast %2 : vector<128xf32> to vector<1x128xf32>
    %cst_2 = arith.constant 6.400000e+01 : f32
    %4 = vector.broadcast %cst_2 : f32 to vector<1x128xf32>
    %5 = arith.divf %3, %4 : vector<1x128xf32>
    %6 = tpu.iota {dimensions = array<i32: 0>} : vector<128x128xi32>
    %7 = tpu.iota {dimensions = array<i32: 1>} : vector<128x128xi32>
    %8 = arith.subi %7, %6 : vector<128x128xi32>
    %cst_3 = arith.constant 0.000000e+00 : f32
    %9 = vector.broadcast %cst_3 : f32 to vector<128x128xf32>
    %c1_i32 = arith.constant 1 : i32
    %10 = vector.broadcast %c1_i32 : i32 to vector<128x128xi32>
    %11 = arith.cmpi eq, %8, %10 : vector<128x128xi32>
    %c0_4 = arith.constant 0 : index
    %12 = memref.load %arg1[%c0_4] : memref<3xf32, #tpu.memory_space<smem>>
    %13 = vector.broadcast %12 : f32 to vector<128x128xf32>
    %14 = arith.select %11, %13, %9 : vector<128x128xi1>, vector<128x128xf32>
    %c0_i32 = arith.constant 0 : i32
    %15 = vector.broadcast %c0_i32 : i32 to vector<128x128xi32>
    %16 = arith.cmpi eq, %8, %15 : vector<128x128xi32>
    %c1 = arith.constant 1 : index
    %17 = memref.load %arg1[%c1] : memref<3xf32, #tpu.memory_space<smem>>
    %18 = vector.broadcast %17 : f32 to vector<128x128xf32>
    %19 = arith.select %16, %18, %14 : vector<128x128xi1>, vector<128x128xf32>
    %c-1_i32 = arith.constant -1 : i32
    %20 = vector.broadcast %c-1_i32 : i32 to vector<128x128xi32>
    %21 = arith.cmpi eq, %8, %20 : vector<128x128xi32>
    %c2 = arith.constant 2 : index
    %22 = memref.load %arg1[%c2] : memref<3xf32, #tpu.memory_space<smem>>
    %23 = vector.broadcast %22 : f32 to vector<128x128xf32>
    %24 = arith.select %21, %23, %19 : vector<128x128xi1>, vector<128x128xf32>
    %cst_5 = arith.constant dense<0.000000e+00> : vector<1x128xf32>
    %25 = tpu.matmul %5, %24, %cst_5 {dimension_numbers = #tpu.dot_dimension_numbers<[1], [0], [0], [1], [0, 0, 1, 1], [], []>} : vector<1x128xf32>, vector<128x128xf32>, vector<1x128xf32> -> vector<1x128xf32>
    %cst_6 = arith.constant 0.000000e+00 : f32
    %26 = vector.broadcast %cst_6 : f32 to vector<1x128xf32>
    %27 = arith.subf %26, %25 : vector<1x128xf32>
    %28 = math.exp %27 : vector<1x128xf32>
    %cst_7 = arith.constant 1.000000e+00 : f32
    %29 = vector.broadcast %cst_7 : f32 to vector<1x128xf32>
    %30 = arith.addf %29, %28 : vector<1x128xf32>
    %31 = tpu.reciprocal %30 {approx = true} : vector<1x128xf32> -> vector<1x128xf32>
    %32 = vector.broadcast %31 : vector<1x128xf32> to vector<64x128xf32>
    %33 = arith.mulf %1, %32 : vector<64x128xf32>
    %c0_8 = arith.constant 0 : index
    %c0_9 = arith.constant 0 : index
    %c0_10 = arith.constant 0 : index
    %34 = vector.load %arg3[%c0_8, %c0_9, %c0_10] : memref<1x64x128xf32, #tpu.memory_space<vmem>>, vector<1x64x128xf32>
    %35 = vector.shape_cast %34 : vector<1x64x128xf32> to vector<64x128xf32>
    %36 = vector.shape_cast %33 : vector<64x128xf32> to vector<1x64x128xf32>
    tpu.vector_store %arg3[%c0_8, %c0_9, %c0_10], %36 {strides = array<i32>} : memref<1x64x128xf32, #tpu.memory_space<vmem>>, vector<1x64x128xf32>,
    return
  }
  func.func @transform_0(%arg0: i32) -> i32 {
    %c0_i32 = arith.constant 0 : i32
    %c0_i32_0 = arith.constant 0 : i32
    return %c0_i32 : i32
  }
  func.func @transform_1(%arg0: i32) -> (i32, i32, i32) {
    %c0_i32 = arith.constant 0 : i32
    %c0_i32_0 = arith.constant 0 : i32
    %c0_i32_1 = arith.constant 0 : i32
    return %arg0, %c0_i32, %c0_i32_0 : i32, i32, i32
  }
  func.func @transform_2(%arg0: i32) -> (i32, i32, i32) {
    %c0_i32 = arith.constant 0 : i32
    %c0_i32_0 = arith.constant 0 : i32
    %c0_i32_1 = arith.constant 0 : i32
    return %arg0, %c0_i32, %c0_i32_0 : i32, i32, i32
  }
}

</mosaic_0001>

<llo_original>
// kernel: tpu_custom_call.1
$region0: #{tpu_custom_call.1}
  #allocation0 [shape = 'u32[]', space=smem, size = 0x4, offset = 0x4, fixed_abs, tag = 'smem constant byte address 0x4 - core index']
  #allocation1 [shape = 'u32[144,128]{1,0:T(1,128)}', space=vmem, size = 0x12000, scoped, tag = 'internal scratch']
  %s0 = inlined_call_operand.hbm [shape: f32[3], index: 0, kind: input, shape index: {}]
  %s1 = inlined_call_operand.hbm [shape: f32[2,64,128], index: 1, kind: input, shape index: {}]
  %s2 = inlined_call_operand.hbm [shape: f32[2,64,128], index: 2, kind: output, shape index: {}]
  %s3 = sld [smem:[#allocation0]]
  $region49: #{tpu_custom_call.1} parent=0
    _
  %s5 = ssub.s32 1, %s3
  %s6 = scalar_select 0, %s5, %s3
  $region1: #{tpu_custom_call.1} parent=0
    #allocation2 [shape = 'u8[512]{0}', space=smem, size = 0x200, scoped, tag = 'input window, operand 0, single buffered']
    #allocation3 [shape = 's32[2]{0}', space=sflag, size = 0x8, scoped, tag = 'scoped memory for tpu_custom_call.1']
    #allocation4 [shape = 's32[2]{0}', space=sflag, size = 0x8, scoped, tag = 'scoped memory for tpu_custom_call.1']
    #allocation5 [shape = 's32[2]{0}', space=sflag, size = 0x8, scoped, tag = 'scoped memory for tpu_custom_call.1']
    #allocation6 [shape = 'u8[65536]{0}', space=vmem, size = 0x10000, scoped, tag = 'input window, operand 1']
    #allocation7 [shape = 'u8[65536]{0}', space=vmem, size = 0x10000, scoped, tag = 'output window, operand 0']
    %7 = vsyncpa [#allocation5], 0
    %8 = vsyncpa [#allocation3], 0
    %s9 = scalar_lea.sflag [#allocation3], 1
    %10 = vsyncpa %s9, 0
    %11 = vsyncpa [#allocation4], 0
    %s12 = scalar_lea.sflag [#allocation4], 1
    %13 = vsyncpa %s12, 0
    loop: start=0, step=1, limit=4
    $region2: #{tpu_custom_call.1} parent=1 // loop_pre_header
      _
    $region3: #{tpu_custom_call.1} parent=1 // loop_header
      %s15 = sphi 0, %s19
      %p16 = scmp.ge.s32.totalorder %s15, 4
      %s23 = sphi 0, %s23
      %s25 = sphi 0, %s23
      %s26 = sphi 0, %s25
      %s40 = sphi 0, %s26
      %s46 = sphi 0, %s48
      %s49 = sphi 0, %s46
      %s50 = sphi 0, %s49
      %s66 = sphi 0, %s50
      %s72 = sphi 0, %s74
      %s75 = sphi 0, %s72
      %s76 = sphi 0, %s75
      %s92 = sphi 0, %s76
    $region4: #{tpu_custom_call.1} parent=1 // loop_header_branch
      %18 = sbr.rel (%p16) target = $region8
    $region5: #{tpu_custom_call.1} parent=1 // loop_body
      %s20 = ssub.s32 %s15, 1
      %s21 = ssub.s32 %s15, 2
      %s22 = sadd.s32 %s15, 1
      %s24 = sadd.s32 %s23, 1
      %p27 = scmp.eq.s32.totalorder %s15, 1
      %p28 = scmp.ne.s32.totalorder %s23, %s25
      %p29 = scmp.eq.s32.totalorder %s15, 0
      %p30 = por %p28, %p29
      %p31 = scmp.ne.s32.totalorder %s23, %s25
      %p32 = scmp.eq.s32.totalorder %s20, 1
      %p33 = por %p31, %p32
      %p34 = scmp.ne.s32.totalorder %s25, %s26
      %p35 = scmp.eq.s32.totalorder %s20, 0
      %p36 = por %p34, %p35
      %p37 = scmp.ne.s32.totalorder %s25, %s26
      %p38 = scmp.eq.s32.totalorder %s21, 1
      %p39 = por %p37, %p38
      %p41 = scmp.ne.s32.totalorder %s26, %s40
      %p42 = scmp.eq.s32.totalorder %s21, 0
      %p43 = por %p41, %p42
      %s44 = ssub.s32 %s15, %s22
      %p45 = scmp.eq.s32.totalorder %s44, 0
      %s47 = sadd.s32 %s46, 1
      %s48 = scalar_select %p45, %s46, %s47
      %p51 = pneg %p45
      %p52 = scmp.eq.s32.totalorder %s15, 1
      %p53 = por %p51, %p52
      %p54 = scmp.ne.s32.totalorder %s46, %s49
      %p55 = scmp.eq.s32.totalorder %s15, 0
      %p56 = por %p54, %p55
      %p57 = scmp.ne.s32.totalorder %s46, %s49
      %p58 = scmp.eq.s32.totalorder %s20, 1
      %p59 = por %p57, %p58
      %p60 = scmp.ne.s32.totalorder %s49, %s50
      %p61 = scmp.eq.s32.totalorder %s20, 0
      %p62 = por %p60, %p61
      %p63 = scmp.ne.s32.totalorder %s49, %s50
      %p64 = scmp.eq.s32.totalorder %s21, 1
      %p65 = por %p63, %p64
      %p67 = scmp.ne.s32.totalorder %s50, %s66
      %p68 = scmp.eq.s32.totalorder %s21, 0
      %p69 = por %p67, %p68
      %s70 = ssub.s32 %s15, %s22
      %p71 = scmp.eq.s32.totalorder %s70, 0
      %s73 = sadd.s32 %s72, 1
      %s74 = scalar_select %p71, %s72, %s73
      %p77 = pneg %p71
      %p78 = scmp.eq.s32.totalorder %s15, 1
      %p79 = por %p77, %p78
      %p80 = scmp.ne.s32.totalorder %s72, %s75
      %p81 = scmp.eq.s32.totalorder %s15, 0
      %p82 = por %p80, %p81
      %p83 = scmp.ne.s32.totalorder %s72, %s75
      %p84 = scmp.eq.s32.totalorder %s20, 1
      %p85 = por %p83, %p84
      %p86 = scmp.ne.s32.totalorder %s75, %s76
      %p87 = scmp.eq.s32.totalorder %s20, 0
      %p88 = por %p86, %p87
      %p89 = scmp.ne.s32.totalorder %s75, %s76
      %p90 = scmp.eq.s32.totalorder %s21, 1
      %p91 = por %p89, %p90
      %p93 = scmp.ne.s32.totalorder %s76, %s92
      %p94 = scmp.eq.s32.totalorder %s21, 0
      %p95 = por %p93, %p94
      %p96 = scmp.le.s32.totalorder 1, %s15
      %p97 = scmp.lt.s32.totalorder %s15, 3
      %p98 = pnand %p96, %p97
      %p99 = pneg %p98
      // Predicated region
      $region9: #{tpu_custom_call.1} parent=5 // pred_check
        _
      $region10: #{tpu_custom_call.1} parent=5 // pred_check_branch
        %101 = sbr.rel (%p98) target = $region12
      $region11: #{tpu_custom_call.1} parent=5 // pred_region
        %s102 = ssub.s32 %s15, 1
        // Predicated region
        $region13: #{tpu_custom_call.1} parent=11 // pred_check
          %p103 = pneg %p36
        $region14: #{tpu_custom_call.1} parent=11 // pred_check_branch
          %105 = sbr.rel (%p103) target = $region16
        $region15: #{tpu_custom_call.1} parent=11 // pred_region
          %s107 = ssub.s32 16, 16
          %108 = vsyncadd [#allocation5], %s107
          %111 = dma.hbm_to_smem %s0, 16, [#allocation2], [#allocation5]
        $region16: #{tpu_custom_call.1} parent=11 // pred_fallthru
          _
      $region12: #{tpu_custom_call.1} parent=5 // pred_fallthru
        _
      %p112 = scmp.lt.s32.totalorder %s15, 2
      // Predicated region
      $region17: #{tpu_custom_call.1} parent=5 // pred_check
        %p113 = pneg %p112
      $region18: #{tpu_custom_call.1} parent=5 // pred_check_branch
        %115 = sbr.rel (%p113) target = $region20
      $region19: #{tpu_custom_call.1} parent=5 // pred_region
        // Predicated region
        $region21: #{tpu_custom_call.1} parent=19 // pred_check
          %p116 = pneg %p56
        $region22: #{tpu_custom_call.1} parent=19 // pred_check_branch
          %118 = sbr.rel (%p116) target = $region24
        $region23: #{tpu_custom_call.1} parent=19 // pred_region
          %s119 = sand.u32 %s46, 1
          %s120 = scalar_lea.sflag [#allocation3], %s119
          %s121 = sand.u32 %s46, 1
          %s122 = smul.addr %s121, 64
          %s123 = scalar_lea.vmem [#allocation6], %s122
          %s125 = ssub.s32 1024, 1024
          %126 = vsyncadd %s120, %s125
          %s127 = smul.addr %s15, 8
          %s128 = smul.addr %s127, 128
          %s129 = scalar_lea.hbm %s1, %s128
          %s130 = sshll.u32 %s123, 4
          %s131 = int_to_ptr.vmem [resolvable:$true] %s130
          %136 = dma.hbm_to_vmem [thread:$0]  %s129, 1024, %s131, %s120, 128, 128, 8
        $region24: #{tpu_custom_call.1} parent=19 // pred_fallthru
          _
      $region20: #{tpu_custom_call.1} parent=5 // pred_fallthru
        _
      %p137 = scmp.le.s32.totalorder 1, %s15
      %p138 = scmp.lt.s32.totalorder %s15, 3
      %p139 = pnand %p137, %p138
      %p140 = pneg %p139
      // Predicated region
      $region25: #{tpu_custom_call.1} parent=5 // pred_check
        _
      $region26: #{tpu_custom_call.1} parent=5 // pred_check_branch
        %142 = sbr.rel (%p139) target = $region28
      $region27: #{tpu_custom_call.1} parent=5 // pred_region
        %s143 = ssub.s32 %s15, 1
        // Predicated region
        $region29: #{tpu_custom_call.1} parent=27 // pred_check
          %p144 = pneg %p36
        $region30: #{tpu_custom_call.1} parent=27 // pred_check_branch
          %146 = sbr.rel (%p144) target = $region32
        $region31: #{tpu_custom_call.1} parent=27 // pred_region
          %147 = dma.done [#allocation5], 16
        $region32: #{tpu_custom_call.1} parent=27 // pred_fallthru
          _
        %s148 = sand.u32 %s49, 1
        %s149 = scalar_lea.sflag [#allocation3], %s148
        %s150 = sand.u32 %s49, 1
        %s151 = smul.addr %s150, 64
        %s152 = scalar_lea.vmem [#allocation6], %s151
        // Predicated region
        $region33: #{tpu_custom_call.1} parent=27 // pred_check
          %p153 = pneg %p62
        $region34: #{tpu_custom_call.1} parent=27 // pred_check_branch
          %155 = sbr.rel (%p153) target = $region36
        $region35: #{tpu_custom_call.1} parent=27 // pred_region
          %156 = dma.done %s149, 1024
        $region36: #{tpu_custom_call.1} parent=27 // pred_fallthru
          _
        %157 = sfence
        %p158 = pneg %p36
        %p159 = pneg %p33
        %s160 = sand.u32 %s49, 1
        %s161 = scalar_lea.sflag [#allocation3], %s160
        %s162 = sand.u32 %s49, 1
        %s163 = smul.addr %s162, 64
        %s164 = scalar_lea.vmem [#allocation6], %s163
        %p165 = pneg %p62
        %p166 = pneg %p59
        %p167 = pneg %p88
        %p168 = pneg %p85
        %s169 = sand.u32 %s75, 1
        %s170 = scalar_lea.sflag [#allocation4], %s169
        %s171 = sand.u32 %s75, 1
        %s172 = smul.addr %s171, 64
        %s173 = scalar_lea.vmem [#allocation7], %s172
        %v174 = vld [vmem:[%s152] sm:$0xff]
        %v175 = vld [vmem:[%s152 + $0x8] sm:$0xff]
        %v176 = vld [vmem:[%s152 + $0x10] sm:$0xff]
        %v177 = vld [vmem:[%s152 + $0x18] sm:$0xff]
        %v178 = vld [vmem:[%s152 + $0x20] sm:$0xff]
        %v179 = vld [vmem:[%s152 + $0x28] sm:$0xff]
        %v180 = vld [vmem:[%s152 + $0x30] sm:$0xff]
        %v181 = vld [vmem:[%s152 + $0x38] sm:$0xff]
        %v182 = vadd.f32 %v174, %v175
        %v183 = vadd.f32 %v182, %v176
        %v184 = vadd.f32 %v183, %v177
        %v185 = vadd.f32 %v184, %v178
        %v186 = vadd.f32 %v185, %v179
        %v187 = vadd.f32 %v186, %v180
        %v188 = vadd.f32 %v187, %v181
        %v189 = vrot.slane %v188, 4
        %v190 = vadd.f32 %v188, %v189
        %v191 = vrot.slane %v190, 2
        %v192 = vadd.f32 %v190, %v191
        %v193 = vrot.slane %v192, 1
        %v194 = vadd.f32 %v192, %v193
        %v195 = vrcp.pop 64.0
        %v196 = vmul.f32 %v194, %v195
        %v197 = vlaneseq
        %v198 = vshrl.u32 %v197, 7
        %v199 = vadd.s32 %v198, 8
        %v200 = vadd.s32 %v198, 16
        %v201 = vadd.s32 %v198, 24
        %v202 = vadd.s32 %v198, 32
        %v203 = vadd.s32 %v198, 40
        %v204 = vadd.s32 %v198, 48
        %v205 = vadd.s32 %v198, 56
        %v206 = vadd.s32 %v198, 64
        %v207 = vadd.s32 %v198, 72
        %v208 = vadd.s32 %v198, 80
        %v209 = vadd.s32 %v198, 88
        %v210 = vadd.s32 %v198, 96
        %v211 = vadd.s32 %v198, 104
        %v212 = vadd.s32 %v198, 112
        %v213 = vadd.s32 %v198, 120
        %v214 = vlaneseq
        %v215 = vand.u32 %v214, 127
        %v216 = vsub.s32 %v215, %v198
        %v217 = vsub.s32 %v215, %v199
        %v218 = vsub.s32 %v215, %v200
        %v219 = vsub.s32 %v215, %v201
        %v220 = vsub.s32 %v215, %v202
        %v221 = vsub.s32 %v215, %v203
        %v222 = vsub.s32 %v215, %v204
        %v223 = vsub.s32 %v215, %v205
        %v224 = vsub.s32 %v215, %v206
        %v225 = vsub.s32 %v215, %v207
        %v226 = vsub.s32 %v215, %v208
        %v227 = vsub.s32 %v215, %v209
        %v228 = vsub.s32 %v215, %v210
        %v229 = vsub.s32 %v215, %v211
        %v230 = vsub.s32 %v215, %v212
        %v231 = vsub.s32 %v215, %v213
        %vm232 = vcmp.eq.s32.totalorder %v216, 1
        %vm233 = vcmp.eq.s32.totalorder %v217, 1
        %vm234 = vcmp.eq.s32.totalorder %v218, 1
        %vm235 = vcmp.eq.s32.totalorder %v219, 1
        %vm236 = vcmp.eq.s32.totalorder %v220, 1
        %vm237 = vcmp.eq.s32.totalorder %v221, 1
        %vm238 = vcmp.eq.s32.totalorder %v222, 1
        %vm239 = vcmp.eq.s32.totalorder %v223, 1
        %vm240 = vcmp.eq.s32.totalorder %v224, 1
        %vm241 = vcmp.eq.s32.totalorder %v225, 1
        %vm242 = vcmp.eq.s32.totalorder %v226, 1
        %vm243 = vcmp.eq.s32.totalorder %v227, 1
        %vm244 = vcmp.eq.s32.totalorder %v228, 1
        %vm245 = vcmp.eq.s32.totalorder %v229, 1
        %vm246 = vcmp.eq.s32.totalorder %v230, 1
        %vm247 = vcmp.eq.s32.totalorder %v231, 1
        %s248 = sld [smem:[#allocation2]]
        %v249 = vstv %s248
        %v250 = vsel %vm232, %v249, 0.0
        %v251 = vsel %vm233, %v249, 0.0
        %v252 = vsel %vm234, %v249, 0.0
        %v253 = vsel %vm235, %v249, 0.0
        %v254 = vsel %vm236, %v249, 0.0
        %v255 = vsel %vm237, %v249, 0.0
        %v256 = vsel %vm238, %v249, 0.0
        %v257 = vsel %vm239, %v249, 0.0
        %v258 = vsel %vm240, %v249, 0.0
        %v259 = vsel %vm241, %v249, 0.0
        %v260 = vsel %vm242, %v249, 0.0
        %v261 = vsel %vm243, %v249, 0.0
        %v262 = vsel %vm244, %v249, 0.0
        %v263 = vsel %vm245, %v249, 0.0
        %v264 = vsel %vm246, %v249, 0.0
        %v265 = vsel %vm247, %v249, 0.0
        %vm266 = vcmp.eq.s32.totalorder %v216, 0
        %vm267 = vcmp.eq.s32.totalorder %v217, 0
        %vm268 = vcmp.eq.s32.totalorder %v218, 0
        %vm269 = vcmp.eq.s32.totalorder %v219, 0
        %vm270 = vcmp.eq.s32.totalorder %v220, 0
        %vm271 = vcmp.eq.s32.totalorder %v221, 0
        %vm272 = vcmp.eq.s32.totalorder %v222, 0
        %vm273 = vcmp.eq.s32.totalorder %v223, 0
        %vm274 = vcmp.eq.s32.totalorder %v224, 0
        %vm275 = vcmp.eq.s32.totalorder %v225, 0
        %vm276 = vcmp.eq.s32.totalorder %v226, 0
        %vm277 = vcmp.eq.s32.totalorder %v227, 0
        %vm278 = vcmp.eq.s32.totalorder %v228, 0
        %vm279 = vcmp.eq.s32.totalorder %v229, 0
        %vm280 = vcmp.eq.s32.totalorder %v230, 0
        %vm281 = vcmp.eq.s32.totalorder %v231, 0
        %s282 = sld [smem:[#allocation2 + $0x1]]
        %v283 = vstv %s282
        %v284 = vsel %vm266, %v283, %v250
        %v285 = vsel %vm267, %v283, %v251
        %v286 = vsel %vm268, %v283, %v252
        %v287 = vsel %vm269, %v283, %v253
        %v288 = vsel %vm270, %v283, %v254
        %v289 = vsel %vm271, %v283, %v255
        %v290 = vsel %vm272, %v283, %v256
        %v291 = vsel %vm273, %v283, %v257
        %v292 = vsel %vm274, %v283, %v258
        %v293 = vsel %vm275, %v283, %v259
        %v294 = vsel %vm276, %v283, %v260
        %v295 = vsel %vm277, %v283, %v261
        %v296 = vsel %vm278, %v283, %v262
        %v297 = vsel %vm279, %v283, %v263
        %v298 = vsel %vm280, %v283, %v264
        %v299 = vsel %vm281, %v283, %v265
        %vm300 = vcmp.eq.s32.totalorder %v216, 4294967295
        %vm301 = vcmp.eq.s32.totalorder %v217, 4294967295
        %vm302 = vcmp.eq.s32.totalorder %v218, 4294967295
        %vm303 = vcmp.eq.s32.totalorder %v219, 4294967295
        %vm304 = vcmp.eq.s32.totalorder %v220, 4294967295
        %vm305 = vcmp.eq.s32.totalorder %v221, 4294967295
        %vm306 = vcmp.eq.s32.totalorder %v222, 4294967295
        %vm307 = vcmp.eq.s32.totalorder %v223, 4294967295
        %vm308 = vcmp.eq.s32.totalorder %v224, 4294967295
        %vm309 = vcmp.eq.s32.totalorder %v225, 4294967295
        %vm310 = vcmp.eq.s32.totalorder %v226, 4294967295
        %vm311 = vcmp.eq.s32.totalorder %v227, 4294967295
        %vm312 = vcmp.eq.s32.totalorder %v228, 4294967295
        %vm313 = vcmp.eq.s32.totalorder %v229, 4294967295
        %vm314 = vcmp.eq.s32.totalorder %v230, 4294967295
        %vm315 = vcmp.eq.s32.totalorder %v231, 4294967295
        %s316 = sld [smem:[#allocation2 + $0x2]]
        %v317 = vstv %s316
        %v318 = vsel %vm300, %v317, %v284
        %v319 = vsel %vm301, %v317, %v285
        %v320 = vsel %vm302, %v317, %v286
        %v321 = vsel %vm303, %v317, %v287
        %v322 = vsel %vm304, %v317, %v288
        %v323 = vsel %vm305, %v317, %v289
        %v324 = vsel %vm306, %v317, %v290
        %v325 = vsel %vm307, %v317, %v291
        %v326 = vsel %vm308, %v317, %v292
        %v327 = vsel %vm309, %v317, %v293
        %v328 = vsel %vm310, %v317, %v294
        %v329 = vsel %vm311, %v317, %v295
        %v330 = vsel %vm312, %v317, %v296
        %v331 = vsel %vm313, %v317, %v297
        %v332 = vsel %vm314, %v317, %v298
        %v333 = vsel %vm315, %v317, %v299
        %334 = vmatprep.subr.mxu0 0.0
        %335 = vmatpush1.msra.mxu0 %v318
        %336 = vmatprep.subr.mxu0 0.0
        %337 = vmatpush1.msra.mxu0 %v319
        %338 = vmatprep.subr.mxu0 0.0
        %339 = vmatpush1.msra.mxu0 %v320
        %340 = vmatprep.subr.mxu0 0.0
        %341 = vmatpush1.msra.mxu0 %v321
        %342 = vmatprep.subr.mxu0 0.0
        %343 = vmatpush1.msra.mxu0 %v322
        %344 = vmatprep.subr.mxu0 0.0
        %345 = vmatpush1.msra.mxu0 %v323
        %346 = vmatprep.subr.mxu0 0.0
        %347 = vmatpush1.msra.mxu0 %v324
        %348 = vmatprep.subr.mxu0 0.0
        %349 = vmatpush1.msra.mxu0 %v325
        %350 = vmatprep.subr.mxu0 0.0
        %351 = vmatpush1.msra.mxu0 %v326
        %352 = vmatprep.subr.mxu0 0.0
        %353 = vmatpush1.msra.mxu0 %v327
        %354 = vmatprep.subr.mxu0 0.0
        %355 = vmatpush1.msra.mxu0 %v328
        %356 = vmatprep.subr.mxu0 0.0
        %357 = vmatpush1.msra.mxu0 %v329
        %358 = vmatprep.subr.mxu0 0.0
        %359 = vmatpush1.msra.mxu0 %v330
        %360 = vmatprep.subr.mxu0 0.0
        %361 = vmatpush1.msra.mxu0 %v331
        %362 = vmatprep.subr.mxu0 0.0
        %363 = vmatpush1.msra.mxu0 %v332
        %364 = vmatprep.subr.mxu0 0.0
        %365 = vmatpush1.msra.mxu0 %v333
        %366 = vmatprep.subr.mxu0 0.0
        %367 = vmatpush1.msra.mxu0 0.0
        %368 = vmatprep.subr.mxu0 0.0
        %369 = vmatpush1.msra.mxu0 0.0
        %370 = vmatprep.subr.mxu0 0.0
        %371 = vmatpush1.msra.mxu0 0.0
        %372 = vmatprep.subr.mxu0 0.0
        %373 = vmatpush1.msra.mxu0 0.0
        %374 = vmatprep.subr.mxu0 0.0
        %375 = vmatpush1.msra.mxu0 0.0
        %376 = vmatprep.subr.mxu0 0.0
        %377 = vmatpush1.msra.mxu0 0.0
        %378 = vmatprep.subr.mxu0 0.0
        %379 = vmatpush1.msra.mxu0 0.0
        %380 = vmatprep.subr.mxu0 0.0
        %381 = vmatpush1.msra.mxu0 0.0
        %382 = vmatprep.subr.mxu0 0.0
        %383 = vmatpush1.msra.mxu0 0.0
        %384 = vmatprep.subr.mxu0 0.0
        %385 = vmatpush1.msra.mxu0 0.0
        %386 = vmatprep.subr.mxu0 0.0
        %387 = vmatpush1.msra.mxu0 0.0
        %388 = vmatprep.subr.mxu0 0.0
        %389 = vmatpush1.msra.mxu0 0.0
        %390 = vmatprep.subr.mxu0 0.0
        %391 = vmatpush1.msra.mxu0 0.0
        %392 = vmatprep.subr.mxu0 0.0
        %393 = vmatpush1.msra.mxu0 0.0
        %394 = vmatprep.subr.mxu0 0.0
        %395 = vmatpush1.msra.mxu0 0.0
        %396 = vmatprep.subr.mxu0 0.0
        %397 = vmatpush1.msra.mxu0 0.0
        %398 = vmatprep.mubr.f32.mxu0 0.0
        %399 = vmatmul.mubr.f32.gmra.mrb[0].mxu0 %v196
        %v400 = vpop.f32.mrb[0].mxu0
        %v401 = vadd.f32 0.0, %v400
        %v402 = vpop.f32.mrb[0].mxu0
        %403 = vdwg.mxu0
        %v404 = vsub.f32 0.0, %v401
        %v405 = vmul.f32 %v404, 1.442695
        %v406 = vpow.pop %v405
        %v407 = vadd.f32 %v406, 1.0
        %v408 = vrcp.pop %v407
        %v409 = vlaneseq
        %v410 = vshrl.u32 %v409, 7
        %v411 = vsub.s32 0, %v410
        %v412 = vrot.slane %v408, %v411
        %v413 = vmul.f32 %v174, %v412
        %v414 = vmul.f32 %v175, %v412
        %v415 = vmul.f32 %v176, %v412
        %v416 = vmul.f32 %v177, %v412
        %v417 = vmul.f32 %v178, %v412
        %v418 = vmul.f32 %v179, %v412
        %v419 = vmul.f32 %v180, %v412
        %v420 = vmul.f32 %v181, %v412
        %421 = vst [vmem:[%s173] sm:$0xff] %v413
        %422 = vst [vmem:[%s173 + $0x8] sm:$0xff] %v414
        %423 = vst [vmem:[%s173 + $0x10] sm:$0xff] %v415
        %424 = vst [vmem:[%s173 + $0x18] sm:$0xff] %v416
        %425 = vst [vmem:[%s173 + $0x20] sm:$0xff] %v417
        %426 = vst [vmem:[%s173 + $0x28] sm:$0xff] %v418
        %427 = vst [vmem:[%s173 + $0x30] sm:$0xff] %v419
        %428 = vst [vmem:[%s173 + $0x38] sm:$0xff] %v420
        %s429 = sand.u32 %s75, 1
        %s430 = scalar_lea.sflag [#allocation4], %s429
        %s431 = sand.u32 %s75, 1
        %s432 = smul.addr %s431, 64
        %s433 = scalar_lea.vmem [#allocation7], %s432
        // Predicated region
        $region37: #{tpu_custom_call.1} parent=27 // pred_check
          %p434 = pneg %p85
        $region38: #{tpu_custom_call.1} parent=27 // pred_check_branch
          %436 = sbr.rel (%p434) target = $region40
        $region39: #{tpu_custom_call.1} parent=27 // pred_region
          %s438 = ssub.s32 1024, 1024
          %439 = vsyncadd %s430, %s438
          %s440 = smul.addr %s20, 8
          %s441 = smul.addr %s440, 128
          %s442 = scalar_lea.hbm %s2, %s441
          %s443 = sshll.u32 %s433, 4
          %s444 = int_to_ptr.vmem [resolvable:$true] %s443
          %449 = dma.vmem_to_hbm [thread:$0]  %s444, 1024, %s442, %s430, 128, 128, 8
        $region40: #{tpu_custom_call.1} parent=27 // pred_fallthru
          _
      $region28: #{tpu_custom_call.1} parent=5 // pred_fallthru
        _
      %p450 = scmp.le.s32.totalorder 2, %s15
      // Predicated region
      $region41: #{tpu_custom_call.1} parent=5 // pred_check
        %p451 = pneg %p450
      $region42: #{tpu_custom_call.1} parent=5 // pred_check_branch
        %453 = sbr.rel (%p451) target = $region44
      $region43: #{tpu_custom_call.1} parent=5 // pred_region
        %s454 = ssub.s32 %s15, 2
        // Predicated region
        $region45: #{tpu_custom_call.1} parent=43 // pred_check
          %p455 = pneg %p91
        $region46: #{tpu_custom_call.1} parent=43 // pred_check_branch
          %457 = sbr.rel (%p455) target = $region48
        $region47: #{tpu_custom_call.1} parent=43 // pred_region
          %s458 = sand.u32 %s76, 1
          %s459 = scalar_lea.sflag [#allocation4], %s458
          %s460 = sand.u32 %s76, 1
          %s461 = smul.addr %s460, 64
          %s462 = scalar_lea.vmem [#allocation7], %s461
          %463 = dma.done %s459, 1024
        $region48: #{tpu_custom_call.1} parent=43 // pred_fallthru
          _
      $region44: #{tpu_custom_call.1} parent=5 // pred_fallthru
        _
    $region6: #{tpu_custom_call.1} parent=1 // loop_footer
      %s19 = sadd.s32 1, %s15
    $region7: #{tpu_custom_call.1} parent=1 // loop_footer_branch
      %14 = sbr.rel target = $region3
    $region8: #{tpu_custom_call.1} parent=1 // loop_exit
      _
    %464 = vsyncpa [#allocation3], 1
    %s465 = scalar_lea.sflag [#allocation3], 1
    %466 = vsyncpa %s465, 1
    %467 = vsyncpa [#allocation4], 1
    %s468 = scalar_lea.sflag [#allocation4], 1
    %469 = vsyncpa %s468, 1
    %470 = vsyncpa [#allocation5], 1
    %s471 = scalar_lea.sflag [#allocation5], 1
    %472 = vsyncpa %s471, 1

</llo_original>
